<compile_context>
chip_gen: v7x
topology: tpu7x:2x2x1
jax: 0.10.0
libtpu: 0.0.40
codegen_flags: <defaults>
</compile_context>

<pallas_src>
import functools
import math

import jax
import jax.numpy as jnp
from jax.experimental import pallas as pl
from jax.experimental.pallas import tpu as pltpu


def _attention_kernel(q_ref, k_ref, v_ref, mask_ref,
                      wk_ref, bk_ref, wo_ref, bo_ref,
                      out_ref, attn_ref,
                      kv_ref, *, scale, seq_len):
    # Per-step views:
    #   q_ref:        (tq, D) f32   -- query tile
    #   k_ref, v_ref: (S,  D) f32   -- same block across query tiles (DMA skipped)
    #   mask_ref:     (1,  S) int32
    #   wk_ref/wo_ref:(D,  D) bf16  -- pre-transposed to (in, out) on the host
    #   bk_ref/bo_ref:(1,  D) f32
    #   out_ref:      (tq, D)       attn_ref: (tq, S)
    #   kv_ref:       (2S, D) f32 scratch -- projected [K; V], persists across q tiles
    S = seq_len

    @pl.when(pl.program_id(1) == 0)
    def _project_kv():
        # One stacked matmul for K and V: fills the MXU M dimension and pushes
        # the shared k_linear weight through the MXU once per batch element.
        kv = jnp.concatenate([k_ref[...], v_ref[...]], axis=0)       # (2S, D) f32
        kv_p = jnp.dot(kv.astype(jnp.bfloat16), wk_ref[...],
                       preferred_element_type=jnp.float32) + bk_ref[...]
        kv_ref[...] = kv_p

    # Query projection for this tile; fold the 1/sqrt(d_model) scale into q_p.
    q_p = jnp.dot(q_ref[...].astype(jnp.bfloat16), wk_ref[...],
                  preferred_element_type=jnp.float32) + bk_ref[...]
    q_p = (q_p * scale).astype(jnp.bfloat16)

    k_p = kv_ref[pl.ds(0, S), :].astype(jnp.bfloat16)                # (S, D)
    v_p = kv_ref[pl.ds(S, S), :].astype(jnp.bfloat16)                # (S, D)

    # scores[i, j] = sum_d q_p[i, d] * k_p[j, d]  == q_p @ k_p^T (no transpose op).
    scores = jax.lax.dot_general(q_p, k_p,
                                 dimension_numbers=(((1,), (1,)), ((), ())),
                                 preferred_element_type=jnp.float32)

    # masked_fill(mask == 0, -1e9); mask (1, S) broadcasts over query rows.
    scores = jnp.where(mask_ref[...] == 0, jnp.float32(-1e9), scores)

    # Numerically-stable softmax over the key axis (f32).
    m = jnp.max(scores, axis=-1, keepdims=True)
    e = jnp.exp(scores - m)
    denom = jnp.sum(e, axis=-1, keepdims=True)
    inv = pl.reciprocal(denom, approx=True)      # EUP slot; frees the VPU divide
    attn = e * inv
    attn_ref[...] = attn.astype(attn_ref.dtype)

    ctx = jnp.dot(attn.astype(jnp.bfloat16), v_p,
                  preferred_element_type=jnp.float32)                # (tq, D)

    out = jnp.dot(ctx.astype(jnp.bfloat16), wo_ref[...],
                  preferred_element_type=jnp.float32) + bo_ref[...]
    out_ref[...] = out.astype(out_ref.dtype)


def attention(q, k, v, mask, wk, bk, wo, bo, *, attn_dtype=jnp.float32):
    """q/k/v: (B, S, D) f32; mask: (B, S); wk/wo: (D, D) PyTorch (out,in); bk/bo: (D,)."""
    B, S, D = q.shape
    scale = 1.0 / math.sqrt(D)  # np.sqrt(self.d_k) in the original module

    # Query-tile size: multiple of 8 sublanes, large enough to fill the MXU M
    # dimension; full-S tile for small / ragged S (full-dim blocks are legal).
    if S % 256 == 0:
        tq = 256
    elif S % 128 == 0:
        tq = 128
    else:
        tq = S
    n_q = S // tq

    # One-time host-side weight prep (would be done at parameter-init time in
    # production): transpose (out,in) -> (in,out) so in-kernel projections are
    # plain (M,K)@(K,N) contractions, and cast to bf16 for full-rate MXU.
    wk_t = wk.T.astype(jnp.bfloat16)
    wo_t = wo.T.astype(jnp.bfloat16)
    bk2 = bk.reshape(1, D).astype(jnp.float32)
    bo2 = bo.reshape(1, D).astype(jnp.float32)
    mask3 = mask.reshape(B, 1, S).astype(jnp.int32)

    kernel = functools.partial(_attention_kernel, scale=scale, seq_len=S)

    flops = B * (8 * S * D * D + 4 * S * S * D)
    bytes_accessed = (4 * 3 * B * S * D      # q, k, v in
                      + 2 * 2 * D * D        # bf16 weights
                      + 4 * 2 * D            # biases
                      + 4 * B * S            # mask
                      + 4 * B * S * D        # output
                      + jnp.dtype(attn_dtype).itemsize * B * S * S)  # attention weights

    out, attn = pl.pallas_call(
        kernel,
        out_shape=(
            jax.ShapeDtypeStruct((B, S, D), q.dtype),
            jax.ShapeDtypeStruct((B, S, S), attn_dtype),
        ),
        grid=(B, n_q),
        in_specs=[
            pl.BlockSpec((None, tq, D), lambda b, i: (b, i, 0)),   # q tile
            pl.BlockSpec((None, S, D), lambda b, i: (b, 0, 0)),    # k (constant per batch)
            pl.BlockSpec((None, S, D), lambda b, i: (b, 0, 0)),    # v (constant per batch)
            pl.BlockSpec((None, 1, S), lambda b, i: (b, 0, 0)),    # mask
            pl.BlockSpec((D, D), lambda b, i: (0, 0)),             # wk^T (shared)
            pl.BlockSpec((1, D), lambda b, i: (0, 0)),             # bk
            pl.BlockSpec((D, D), lambda b, i: (0, 0)),             # wo^T (shared)
            pl.BlockSpec((1, D), lambda b, i: (0, 0)),             # bo
        ],
        out_specs=(
            pl.BlockSpec((None, tq, D), lambda b, i: (b, i, 0)),   # output
            pl.BlockSpec((None, tq, S), lambda b, i: (b, i, 0)),   # normalized weights
        ),
        scratch_shapes=[pltpu.VMEM((2 * S, D), jnp.float32)],      # projected [K; V]
        compiler_params=pltpu.CompilerParams(
            # batch axis "parallel" -> shards across the two TensorCores on v7x;
            # q-tile axis "arbitrary" (scratch K/V reuse requires sequential order).
            dimension_semantics=("parallel", "arbitrary"),
            vmem_limit_bytes=32 * 1024 * 1024),
        cost_estimate=pl.CostEstimate(
            flops=flops, transcendentals=B * S * S, bytes_accessed=int(bytes_accessed)),
    )(q, k, v, mask3, wk_t, bk2, wo_t, bo2)

    return out, attn


if __name__ == "__main__":
    # Small shapes consistent with the module: batch=2, seq=8, d_model=32.
    B, S, D = 2, 8, 32
    key = jax.random.PRNGKey(0)
    k0, k1, k2, k3, k4, k5, k6, k7 = jax.random.split(key, 8)

    q = jax.random.normal(k0, (B, S, D), dtype=jnp.float32)
    k = jax.random.normal(k1, (B, S, D), dtype=jnp.float32)
    v = jax.random.normal(k2, (B, S, D), dtype=jnp.float32)
    wk = 0.1 * jax.random.normal(k3, (D, D), dtype=jnp.float32)   # k_linear.weight (out, in)
    bk = 0.1 * jax.random.normal(k4, (D,), dtype=jnp.float32)     # k_linear.bias
    wo = 0.1 * jax.random.normal(k5, (D, D), dtype=jnp.float32)   # out.weight
    bo = 0.1 * jax.random.normal(k6, (D,), dtype=jnp.float32)     # out.bias
    mask = (jax.random.uniform(k7, (B, S)) > 0.25).astype(jnp.int32)

    out, attn = attention(q, k, v, mask, wk, bk, wo, bo)
    out = jax.block_until_ready(out)
    attn = jax.block_until_ready(attn)

    # Plain-JAX f32 reference (same math as the PyTorch forward).
    qp = q @ wk.T + bk
    kp = k @ wk.T + bk
    vp = v @ wk.T + bk
    w = jnp.einsum('bqd,bkd->bqk', qp, kp) / math.sqrt(D)
    w = jnp.where(mask[:, None, :] == 0, -1e9, w)
    nw = jax.nn.softmax(w, axis=-1)
    ref_out = jnp.einsum('bqk,bkd->bqd', nw, vp) @ wo.T + bo

    assert out.shape == (B, S, D)
    assert attn.shape == (B, S, S)
    # Tolerances reflect the deliberate bf16-operand / approx-reciprocal
    # perf tradeoffs (accumulation is still f32).
    assert jnp.allclose(attn, nw, atol=2e-2, rtol=2e-2)
    assert jnp.allclose(out, ref_out, atol=5e-2, rtol=5e-2)

    print("KERNEL_OK")
</pallas_src>

<mosaic_0001>
module attributes {stable_mosaic.version = 11 : i64} {
  func.func @_attention_kernel(%arg0: i32, %arg1: i32, %arg2: memref<1x8x32xf32, #tpu.memory_space<vmem>>, %arg3: memref<1x8x32xf32, #tpu.memory_space<vmem>>, %arg4: memref<1x8x32xf32, #tpu.memory_space<vmem>>, %arg5: memref<1x1x8xi32, #tpu.memory_space<vmem>>, %arg6: memref<32x32xbf16, #tpu.memory_space<vmem>>, %arg7: memref<1x32xf32, #tpu.memory_space<vmem>>, %arg8: memref<32x32xbf16, #tpu.memory_space<vmem>>, %arg9: memref<1x32xf32, #tpu.memory_space<vmem>>, %arg10: memref<1x8x32xf32, #tpu.memory_space<vmem>>, %arg11: memref<1x8x8xf32, #tpu.memory_space<vmem>>, %arg12: memref<16x32xf32, #tpu.memory_space<vmem>>) attributes {dimension_semantics = [#tpu.dimension_semantics<parallel>, #tpu.dimension_semantics<arbitrary>], iteration_bounds = array<i64: 2, 1>, scalar_prefetch = 0 : i64, scratch_operands = 1 : i64, tpu.core_type = #tpu.core_type<tc>, window_params = [{transform_indices = @transform_0, window_bounds = array<i64: 1, 8, 32>}, {transform_indices = @transform_1, window_bounds = array<i64: 1, 8, 32>}, {transform_indices = @transform_2, window_bounds = array<i64: 1, 8, 32>}, {transform_indices = @transform_3, window_bounds = array<i64: 1, 1, 8>}, {pipeline_mode = #tpu.pipeline_mode<synchronous>, transform_indices = @transform_4, window_bounds = array<i64: 32, 32>}, {pipeline_mode = #tpu.pipeline_mode<synchronous>, transform_indices = @transform_5, window_bounds = array<i64: 1, 32>}, {pipeline_mode = #tpu.pipeline_mode<synchronous>, transform_indices = @transform_6, window_bounds = array<i64: 32, 32>}, {pipeline_mode = #tpu.pipeline_mode<synchronous>, transform_indices = @transform_7, window_bounds = array<i64: 1, 32>}, {transform_indices = @transform_8, window_bounds = array<i64: 1, 8, 32>}, {transform_indices = @transform_9, window_bounds = array<i64: 1, 8, 8>}]} {
    %c0_i32 = arith.constant 0 : i32
    %0 = arith.cmpi eq, %arg1, %c0_i32 : i32
    %1 = arith.extui %0 : i1 to i32
    %c0_i32_0 = arith.constant 0 : i32
    %2 = arith.cmpi ne, %1, %c0_i32_0 : i32
    scf.if %2 {
      %c0_31 = arith.constant 0 : index
      %c0_32 = arith.constant 0 : index
      %c0_33 = arith.constant 0 : index
      %51 = vector.load %arg3[%c0_31, %c0_32, %c0_33] : memref<1x8x32xf32, #tpu.memory_space<vmem>>, vector<1x8x32xf32>
      %52 = vector.shape_cast %51 : vector<1x8x32xf32> to vector<8x32xf32>
      %c0_34 = arith.constant 0 : index
      %c0_35 = arith.constant 0 : index
      %c0_36 = arith.constant 0 : index
      %53 = vector.load %arg4[%c0_34, %c0_35, %c0_36] : memref<1x8x32xf32, #tpu.memory_space<vmem>>, vector<1x8x32xf32>
      %54 = vector.shape_cast %53 : vector<1x8x32xf32> to vector<8x32xf32>
      %55 = tpu.concatenate %52, %54 in 0 : vector<8x32xf32>, vector<8x32xf32> -> vector<16x32xf32>
      %56 = arith.truncf %55 : vector<16x32xf32> to vector<16x32xbf16>
      %c0_37 = arith.constant 0 : index
      %c0_38 = arith.constant 0 : index
      %57 = vector.load %arg6[%c0_37, %c0_38] : memref<32x32xbf16, #tpu.memory_space<vmem>>, vector<32x32xbf16>
      %cst_39 = arith.constant dense<0.000000e+00> : vector<16x32xf32>
      %58 = tpu.matmul %56, %57, %cst_39 {dimension_numbers = #tpu.dot_dimension_numbers<[1], [0], [0], [1], [0, 0, 1, 1], [], []>} : vector<16x32xbf16>, vector<32x32xbf16>, vector<16x32xf32> -> vector<16x32xf32>
      %c0_40 = arith.constant 0 : index
      %c0_41 = arith.constant 0 : index
      %59 = vector.load %arg7[%c0_40, %c0_41] : memref<1x32xf32, #tpu.memory_space<vmem>>, vector<1x32xf32>
      %60 = vector.broadcast %59 : vector<1x32xf32> to vector<16x32xf32>
      %61 = arith.addf %58, %60 : vector<16x32xf32>
      %c0_42 = arith.constant 0 : index
      %c0_43 = arith.constant 0 : index
      %62 = vector.load %arg12[%c0_42, %c0_43] : memref<16x32xf32, #tpu.memory_space<vmem>>, vector<16x32xf32>
      tpu.vector_store %arg12[%c0_42, %c0_43], %61 {strides = array<i32>} : memref<16x32xf32, #tpu.memory_space<vmem>>, vector<16x32xf32>,
    } else {
    }
    %c0 = arith.constant 0 : index
    %c0_1 = arith.constant 0 : index
    %c0_2 = arith.constant 0 : index
    %3 = vector.load %arg2[%c0, %c0_1, %c0_2] : memref<1x8x32xf32, #tpu.memory_space<vmem>>, vector<1x8x32xf32>
    %4 = vector.shape_cast %3 : vector<1x8x32xf32> to vector<8x32xf32>
    %5 = arith.truncf %4 : vector<8x32xf32> to vector<8x32xbf16>
    %c0_3 = arith.constant 0 : index
    %c0_4 = arith.constant 0 : index
    %6 = vector.load %arg6[%c0_3, %c0_4] : memref<32x32xbf16, #tpu.memory_space<vmem>>, vector<32x32xbf16>
    %cst = arith.constant dense<0.000000e+00> : vector<8x32xf32>
    %7 = tpu.matmul %5, %6, %cst {dimension_numbers = #tpu.dot_dimension_numbers<[1], [0], [0], [1], [0, 0, 1, 1], [], []>} : vector<8x32xbf16>, vector<32x32xbf16>, vector<8x32xf32> -> vector<8x32xf32>
    %c0_5 = arith.constant 0 : index
    %c0_6 = arith.constant 0 : index
    %8 = vector.load %arg7[%c0_5, %c0_6] : memref<1x32xf32, #tpu.memory_space<vmem>>, vector<1x32xf32>
    %9 = vector.broadcast %8 : vector<1x32xf32> to vector<8x32xf32>
    %10 = arith.addf %7, %9 : vector<8x32xf32>
    %cst_7 = arith.constant 0.176776692 : f32
    %11 = vector.broadcast %cst_7 : f32 to vector<8x32xf32>
    %12 = arith.mulf %10, %11 : vector<8x32xf32>
    %13 = arith.truncf %12 : vector<8x32xf32> to vector<8x32xbf16>
    %c0_8 = arith.constant 0 : index
    %c0_9 = arith.constant 0 : index
    %14 = vector.load %arg12[%c0_8, %c0_9] : memref<16x32xf32, #tpu.memory_space<vmem>>, vector<8x32xf32>
    %15 = arith.truncf %14 : vector<8x32xf32> to vector<8x32xbf16>
    %c8 = arith.constant 8 : index
    %c0_10 = arith.constant 0 : index
    %16 = vector.load %arg12[%c8, %c0_10] : memref<16x32xf32, #tpu.memory_space<vmem>>, vector<8x32xf32>
    %17 = arith.truncf %16 : vector<8x32xf32> to vector<8x32xbf16>
    %cst_11 = arith.constant dense<0.000000e+00> : vector<8x8xf32>
    %18 = tpu.matmul %13, %15, %cst_11 {dimension_numbers = #tpu.dot_dimension_numbers<[1], [1], [0], [0], [0, 0, 1, 0], [], []>} : vector<8x32xbf16>, vector<8x32xbf16>, vector<8x8xf32> -> vector<8x8xf32>
    %c0_12 = arith.constant 0 : index
    %c0_13 = arith.constant 0 : index
    %c0_14 = arith.constant 0 : index
    %19 = vector.load %arg5[%c0_12, %c0_13, %c0_14] : memref<1x1x8xi32, #tpu.memory_space<vmem>>, vector<1x1x8xi32>
    %20 = vector.shape_cast %19 : vector<1x1x8xi32> to vector<1x8xi32>
    %c0_i32_15 = arith.constant 0 : i32
    %21 = vector.broadcast %c0_i32_15 : i32 to vector<1x8xi32>
    %22 = arith.cmpi eq, %20, %21 : vector<1x8xi32>
    %cst_16 = arith.constant -1.000000e+09 : f32
    %23 = vector.shape_cast %22 : vector<1x8xi1> to vector<1x8xi1>
    %24 = vector.broadcast %23 : vector<1x8xi1> to vector<8x8xi1>
    %25 = vector.broadcast %cst_16 : f32 to vector<8x8xf32>
    %26 = arith.select %24, %25, %18 : vector<8x8xi1>, vector<8x8xf32>
    %cst_17 = arith.constant dense<0xFF800000> : vector<8xf32>
    %27 = vector.multi_reduction <maximumf>, %26, %cst_17 [1] : vector<8x8xf32> to vector<8xf32>
    %28 = vector.shape_cast %27 : vector<8xf32> to vector<8x1xf32>
    %29 = vector.broadcast %28 : vector<8x1xf32> to vector<8x8xf32>
    %30 = arith.subf %26, %29 : vector<8x8xf32>
    %31 = math.exp %30 : vector<8x8xf32>
    %cst_18 = arith.constant dense<0.000000e+00> : vector<8xf32>
    %32 = vector.multi_reduction <add>, %31, %cst_18 [1] : vector<8x8xf32> to vector<8xf32>
    %33 = vector.shape_cast %32 : vector<8xf32> to vector<8x1xf32>
    %34 = tpu.reciprocal %33 {approx = true} : vector<8x1xf32> -> vector<8x1xf32>
    %35 = vector.broadcast %34 : vector<8x1xf32> to vector<8x8xf32>
    %36 = arith.mulf %31, %35 : vector<8x8xf32>
    %c0_19 = arith.constant 0 : index
    %c0_20 = arith.constant 0 : index
    %c0_21 = arith.constant 0 : index
    %37 = vector.load %arg11[%c0_19, %c0_20, %c0_21] : memref<1x8x8xf32, #tpu.memory_space<vmem>>, vector<1x8x8xf32>
    %38 = vector.shape_cast %37 : vector<1x8x8xf32> to vector<8x8xf32>
    %39 = vector.shape_cast %36 : vector<8x8xf32> to vector<1x8x8xf32>
    tpu.vector_store %arg11[%c0_19, %c0_20, %c0_21], %39 {strides = array<i32>} : memref<1x8x8xf32, #tpu.memory_space<vmem>>, vector<1x8x8xf32>,
    %40 = arith.truncf %36 : vector<8x8xf32> to vector<8x8xbf16>
    %cst_22 = arith.constant dense<0.000000e+00> : vector<8x32xf32>
    %41 = tpu.matmul %40, %17, %cst_22 {dimension_numbers = #tpu.dot_dimension_numbers<[1], [0], [0], [1], [0, 0, 1, 1], [], []>} : vector<8x8xbf16>, vector<8x32xbf16>, vector<8x32xf32> -> vector<8x32xf32>
    %42 = arith.truncf %41 : vector<8x32xf32> to vector<8x32xbf16>
    %c0_23 = arith.constant 0 : index
    %c0_24 = arith.constant 0 : index
    %43 = vector.load %arg8[%c0_23, %c0_24] : memref<32x32xbf16, #tpu.memory_space<vmem>>, vector<32x32xbf16>
    %cst_25 = arith.constant dense<0.000000e+00> : vector<8x32xf32>
    %44 = tpu.matmul %42, %43, %cst_25 {dimension_numbers = #tpu.dot_dimension_numbers<[1], [0], [0], [1], [0, 0, 1, 1], [], []>} : vector<8x32xbf16>, vector<32x32xbf16>, vector<8x32xf32> -> vector<8x32xf32>
    %c0_26 = arith.constant 0 : index
    %c0_27 = arith.constant 0 : index
    %45 = vector.load %arg9[%c0_26, %c0_27] : memref<1x32xf32, #tpu.memory_space<vmem>>, vector<1x32xf32>
    %46 = vector.broadcast %45 : vector<1x32xf32> to vector<8x32xf32>
    %47 = arith.addf %44, %46 : vector<8x32xf32>
    %c0_28 = arith.constant 0 : index
    %c0_29 = arith.constant 0 : index
    %c0_30 = arith.constant 0 : index
    %48 = vector.load %arg10[%c0_28, %c0_29, %c0_30] : memref<1x8x32xf32, #tpu.memory_space<vmem>>, vector<1x8x32xf32>
    %49 = vector.shape_cast %48 : vector<1x8x32xf32> to vector<8x32xf32>
    %50 = vector.shape_cast %47 : vector<8x32xf32> to vector<1x8x32xf32>
    tpu.vector_store %arg10[%c0_28, %c0_29, %c0_30], %50 {strides = array<i32>} : memref<1x8x32xf32, #tpu.memory_space<vmem>>, vector<1x8x32xf32>,
    return
  }
  func.func @transform_0(%arg0: i32, %arg1: i32) -> (i32, i32, i32) {
    %c0_i32 = arith.constant 0 : i32
    %c0_i32_0 = arith.constant 0 : i32
    return %arg0, %arg1, %c0_i32 : i32, i32, i32
  }
  func.func @transform_1(%arg0: i32, %arg1: i32) -> (i32, i32, i32) {
    %c0_i32 = arith.constant 0 : i32
    %c0_i32_0 = arith.constant 0 : i32
    %c0_i32_1 = arith.constant 0 : i32
    return %arg0, %c0_i32, %c0_i32_0 : i32, i32, i32
  }
  func.func @transform_2(%arg0: i32, %arg1: i32) -> (i32, i32, i32) {
    %c0_i32 = arith.constant 0 : i32
    %c0_i32_0 = arith.constant 0 : i32
    %c0_i32_1 = arith.constant 0 : i32
    return %arg0, %c0_i32, %c0_i32_0 : i32, i32, i32
  }
  func.func @transform_3(%arg0: i32, %arg1: i32) -> (i32, i32, i32) {
    %c0_i32 = arith.constant 0 : i32
    %c0_i32_0 = arith.constant 0 : i32
    %c0_i32_1 = arith.constant 0 : i32
    return %arg0, %c0_i32, %c0_i32_0 : i32, i32, i32
  }
  func.func @transform_4(%arg0: i32, %arg1: i32) -> (i32, i32) {
    %c0_i32 = arith.constant 0 : i32
    %c0_i32_0 = arith.constant 0 : i32
    %c0_i32_1 = arith.constant 0 : i32
    return %c0_i32, %c0_i32_0 : i32, i32
  }
  func.func @transform_5(%arg0: i32, %arg1: i32) -> (i32, i32) {
    %c0_i32 = arith.constant 0 : i32
    %c0_i32_0 = arith.constant 0 : i32
    %c0_i32_1 = arith.constant 0 : i32
    return %c0_i32, %c0_i32_0 : i32, i32
  }
  func.func @transform_6(%arg0: i32, %arg1: i32) -> (i32, i32) {
    %c0_i32 = arith.constant 0 : i32
    %c0_i32_0 = arith.constant 0 : i32
    %c0_i32_1 = arith.constant 0 : i32
    return %c0_i32, %c0_i32_0 : i32, i32
  }
  func.func @transform_7(%arg0: i32, %arg1: i32) -> (i32, i32) {
    %c0_i32 = arith.constant 0 : i32
    %c0_i32_0 = arith.constant 0 : i32
    %c0_i32_1 = arith.constant 0 : i32
    return %c0_i32, %c0_i32_0 : i32, i32
  }
  func.func @transform_8(%arg0: i32, %arg1: i32) -> (i32, i32, i32) {
    %c0_i32 = arith.constant 0 : i32
    %c0_i32_0 = arith.constant 0 : i32
    return %arg0, %arg1, %c0_i32 : i32, i32, i32
  }
  func.func @transform_9(%arg0: i32, %arg1: i32) -> (i32, i32, i32) {
    %c0_i32 = arith.constant 0 : i32
    %c0_i32_0 = arith.constant 0 : i32
    return %arg0, %arg1, %c0_i32 : i32, i32, i32
  }
}

</mosaic_0001>

<llo_original>
// kernel: tpu_custom_call.1
$region0: #{tpu_custom_call.1}
  #allocation0 [shape = 'u32[]', space=smem, size = 0x4, offset = 0x4, fixed_abs, tag = 'smem constant byte address 0x4 - core index']
  #allocation1 [shape = 'u32[144,128]{1,0:T(1,128)}', space=vmem, size = 0x12000, scoped, tag = 'internal scratch']
  #allocation2 [shape = 'f32[16,32]{1,0:T(8,128)}', space=vmem, size = 0x2000, scoped, tag = 'scratch operand']
  %s0 = inlined_call_operand.hbm [shape: f32[2,8,32], index: 0, kind: input, shape index: {}]
  %s1 = inlined_call_operand.hbm [shape: f32[2,8,32], index: 1, kind: input, shape index: {}]
  %s2 = inlined_call_operand.hbm [shape: f32[2,8,32], index: 2, kind: input, shape index: {}]
  %s3 = inlined_call_operand.vmem [shape: s32[2,1,8], index: 3, kind: input, shape index: {}]
  %s4 = inlined_call_operand.hbm [shape: bf16[32,32], index: 4, kind: input, shape index: {}]
  %s5 = inlined_call_operand.vmem [shape: f32[1,32], index: 5, kind: input, shape index: {}]
  %s6 = inlined_call_operand.vmem [shape: bf16[32,32], index: 6, kind: input, shape index: {}]
  %s7 = inlined_call_operand.vmem [shape: f32[1,32], index: 7, kind: input, shape index: {}]
  %s8 = inlined_call_operand.hbm [shape: f32[2,8,32], index: 8, kind: output, shape index: {0}]
  %s9 = inlined_call_operand.hbm [shape: f32[2,8,8], index: 9, kind: output, shape index: {1}]
  %10 = xla_tuple %s8, %s9
  %s11 = sld [smem:[#allocation0]]
  $region93: #{tpu_custom_call.1} parent=0
    _
  %s13 = ssub.s32 1, %s11
  %s14 = scalar_select 0, %s13, %s11
  $region1: #{tpu_custom_call.1} parent=0
    #allocation3 [shape = 'u8[8192]{0}', space=vmem, size = 0x2000, scoped, tag = 'input window, operand 0']
    #allocation4 [shape = 's32[2]{0}', space=sflag, size = 0x8, scoped, tag = 'scoped memory for tpu_custom_call.1']
    #allocation5 [shape = 's32[2]{0}', space=sflag, size = 0x8, scoped, tag = 'scoped memory for tpu_custom_call.1']
    #allocation6 [shape = 'u8[8192]{0}', space=vmem, size = 0x2000, scoped, tag = 'input window, operand 1']
    #allocation7 [shape = 's32[2]{0}', space=sflag, size = 0x8, scoped, tag = 'scoped memory for tpu_custom_call.1']
    #allocation8 [shape = 'u8[8192]{0}', space=vmem, size = 0x2000, scoped, tag = 'input window, operand 2']
    #allocation9 [shape = 'u8[8192]{0}', space=vmem, size = 0x2000, scoped, tag = 'input window, operand 4, single buffered']
    #allocation10 [shape = 's32[1]{0}', space=sflag, size = 0x4, scoped, tag = 'scoped memory for tpu_custom_call.1']
    #allocation11 [shape = 'u8[8192]{0}', space=vmem, size = 0x2000, scoped, tag = 'output window, operand 0']
    #allocation12 [shape = 'u8[8192]{0}', space=vmem, size = 0x2000, scoped, tag = 'output window, operand 1']
    #allocation13 [shape = 's32[2]{0}', space=sflag, size = 0x8, scoped, tag = 'scoped memory for tpu_custom_call.1']
    %15 = vsyncpa [#allocation4], 0
    %s16 = scalar_lea.sflag [#allocation4], 1
    %17 = vsyncpa %s16, 0
    %18 = vsyncpa [#allocation7], 0
    %s19 = scalar_lea.sflag [#allocation7], 1
    %20 = vsyncpa %s19, 0
    %21 = vsyncpa [#allocation10], 0
    %22 = vsyncpa [#allocation5], 0
    %s23 = scalar_lea.sflag [#allocation5], 1
    %24 = vsyncpa %s23, 0
    %25 = vsyncpa [#allocation13], 0
    %s26 = scalar_lea.sflag [#allocation13], 1
    %27 = vsyncpa %s26, 0
    loop: start=0, step=1, limit=4
    $region2: #{tpu_custom_call.1} parent=1 // loop_pre_header
      _
    $region3: #{tpu_custom_call.1} parent=1 // loop_header
      %s29 = sphi 0, %s33
      %p30 = scmp.ge.s32.totalorder %s29, 4
      %s36 = sphi 0, %s48
      %s37 = sphi 0, %s44
      %s38 = sphi 0, %s36
      %s39 = sphi 0, %s37
      %s40 = sphi 0, %s38
      %s41 = sphi 0, %s39
      %s53 = sphi 0, %s55
      %s56 = sphi 0, %s53
      %s57 = sphi 0, %s56
      %s73 = sphi 0, %s57
      %s79 = sphi 0, %s81
      %s82 = sphi 0, %s79
      %s83 = sphi 0, %s82
      %s99 = sphi 0, %s83
      %s105 = sphi 0, %s107
      %s108 = sphi 0, %s105
      %s109 = sphi 0, %s108
      %s125 = sphi 0, %s109
      %s131 = sphi 0, %s133
      %s134 = sphi 0, %s131
      %s135 = sphi 0, %s134
      %s151 = sphi 0, %s135
      %s155 = sphi 0, %s155
      %s157 = sphi 0, %s155
      %s158 = sphi 0, %s157
      %s172 = sphi 0, %s158
      %s176 = sphi 0, %s176
      %s178 = sphi 0, %s176
      %s179 = sphi 0, %s178
      %s193 = sphi 0, %s179
      %s197 = sphi 0, %s197
      %s199 = sphi 0, %s197
      %s200 = sphi 0, %s199
      %s214 = sphi 0, %s200
      %s218 = sphi 0, %s218
      %s220 = sphi 0, %s218
      %s221 = sphi 0, %s220
      %s235 = sphi 0, %s221
      %s243 = sphi 0, %s245
      %s246 = sphi 0, %s243
      %s247 = sphi 0, %s246
      %s263 = sphi 0, %s247
      %s271 = sphi 0, %s273
      %s274 = sphi 0, %s271
      %s275 = sphi 0, %s274
      %s291 = sphi 0, %s275
    $region4: #{tpu_custom_call.1} parent=1 // loop_header_branch
      %32 = sbr.rel (%p30) target = $region8
    $region5: #{tpu_custom_call.1} parent=1 // loop_body
      %s34 = ssub.s32 %s29, 1
      %s35 = ssub.s32 %s29, 2
      %s42 = sadd.s32 1, %s37
      %p43 = scmp.ge.s32.totalorder %s42, 1
      %s44 = scalar_select %p43, 0, %s42
      %s45 = sadd.s32 1, %s36
      %s46 = scalar_select %p43, %s45, %s36
      %p47 = scmp.ge.s32.totalorder %s46, 2
      %s48 = scalar_select %p47, 0, %s46
      %s49 = ssub.s32 %s36, %s48
      %s50 = ssub.s32 %s37, %s44
      %s51 = sor.u32 %s49, %s50
      %p52 = scmp.eq.s32.totalorder %s51, 0
      %s54 = sadd.s32 %s53, 1
      %s55 = scalar_select %p52, %s53, %s54
      %p58 = pneg %p52
      %p59 = scmp.eq.s32.totalorder %s29, 1
      %p60 = por %p58, %p59
      %p61 = scmp.ne.s32.totalorder %s53, %s56
      %p62 = scmp.eq.s32.totalorder %s29, 0
      %p63 = por %p61, %p62
      %p64 = scmp.ne.s32.totalorder %s53, %s56
      %p65 = scmp.eq.s32.totalorder %s34, 1
      %p66 = por %p64, %p65
      %p67 = scmp.ne.s32.totalorder %s56, %s57
      %p68 = scmp.eq.s32.totalorder %s34, 0
      %p69 = por %p67, %p68
      %p70 = scmp.ne.s32.totalorder %s56, %s57
      %p71 = scmp.eq.s32.totalorder %s35, 1
      %p72 = por %p70, %p71
      %p74 = scmp.ne.s32.totalorder %s57, %s73
      %p75 = scmp.eq.s32.totalorder %s35, 0
      %p76 = por %p74, %p75
      %s77 = ssub.s32 %s36, %s48
      %p78 = scmp.eq.s32.totalorder %s77, 0
      %s80 = sadd.s32 %s79, 1
      %s81 = scalar_select %p78, %s79, %s80
      %p84 = pneg %p78
      %p85 = scmp.eq.s32.totalorder %s29, 1
      %p86 = por %p84, %p85
      %p87 = scmp.ne.s32.totalorder %s79, %s82
      %p88 = scmp.eq.s32.totalorder %s29, 0
      %p89 = por %p87, %p88
      %p90 = scmp.ne.s32.totalorder %s79, %s82
      %p91 = scmp.eq.s32.totalorder %s34, 1
      %p92 = por %p90, %p91
      %p93 = scmp.ne.s32.totalorder %s82, %s83
      %p94 = scmp.eq.s32.totalorder %s34, 0
      %p95 = por %p93, %p94
      %p96 = scmp.ne.s32.totalorder %s82, %s83
      %p97 = scmp.eq.s32.totalorder %s35, 1
      %p98 = por %p96, %p97
      %p100 = scmp.ne.s32.totalorder %s83, %s99
      %p101 = scmp.eq.s32.totalorder %s35, 0
      %p102 = por %p100, %p101
      %s103 = ssub.s32 %s36, %s48
      %p104 = scmp.eq.s32.totalorder %s103, 0
      %s106 = sadd.s32 %s105, 1
      %s107 = scalar_select %p104, %s105, %s106
      %p110 = pneg %p104
      %p111 = scmp.eq.s32.totalorder %s29, 1
      %p112 = por %p110, %p111
      %p113 = scmp.ne.s32.totalorder %s105, %s108
      %p114 = scmp.eq.s32.totalorder %s29, 0
      %p115 = por %p113, %p114
      %p116 = scmp.ne.s32.totalorder %s105, %s108
      %p117 = scmp.eq.s32.totalorder %s34, 1
      %p118 = por %p116, %p117
      %p119 = scmp.ne.s32.totalorder %s108, %s109
      %p120 = scmp.eq.s32.totalorder %s34, 0
      %p121 = por %p119, %p120
      %p122 = scmp.ne.s32.totalorder %s108, %s109
      %p123 = scmp.eq.s32.totalorder %s35, 1
      %p124 = por %p122, %p123
      %p126 = scmp.ne.s32.totalorder %s109, %s125
      %p127 = scmp.eq.s32.totalorder %s35, 0
      %p128 = por %p126, %p127
      %s129 = ssub.s32 %s36, %s48
      %p130 = scmp.eq.s32.totalorder %s129, 0
      %s132 = sadd.s32 %s131, 1
      %s133 = scalar_select %p130, %s131, %s132
      %p136 = pneg %p130
      %p137 = scmp.eq.s32.totalorder %s29, 1
      %p138 = por %p136, %p137
      %p139 = scmp.ne.s32.totalorder %s131, %s134
      %p140 = scmp.eq.s32.totalorder %s29, 0
      %p141 = por %p139, %p140
      %p142 = scmp.ne.s32.totalorder %s131, %s134
      %p143 = scmp.eq.s32.totalorder %s34, 1
      %p144 = por %p142, %p143
      %p145 = scmp.ne.s32.totalorder %s134, %s135
      %p146 = scmp.eq.s32.totalorder %s34, 0
      %p147 = por %p145, %p146
      %p148 = scmp.ne.s32.totalorder %s134, %s135
      %p149 = scmp.eq.s32.totalorder %s35, 1
      %p150 = por %p148, %p149
      %p152 = scmp.ne.s32.totalorder %s135, %s151
      %p153 = scmp.eq.s32.totalorder %s35, 0
      %p154 = por %p152, %p153
      %s156 = sadd.s32 %s155, 1
      %p159 = scmp.eq.s32.totalorder %s29, 1
      %p160 = scmp.ne.s32.totalorder %s155, %s157
      %p161 = scmp.eq.s32.totalorder %s29, 0
      %p162 = por %p160, %p161
      %p163 = scmp.ne.s32.totalorder %s155, %s157
      %p164 = scmp.eq.s32.totalorder %s34, 1
      %p165 = por %p163, %p164
      %p166 = scmp.ne.s32.totalorder %s157, %s158
      %p167 = scmp.eq.s32.totalorder %s34, 0
      %p168 = por %p166, %p167
      %p169 = scmp.ne.s32.totalorder %s157, %s158
      %p170 = scmp.eq.s32.totalorder %s35, 1
      %p171 = por %p169, %p170
      %p173 = scmp.ne.s32.totalorder %s158, %s172
      %p174 = scmp.eq.s32.totalorder %s35, 0
      %p175 = por %p173, %p174
      %s177 = sadd.s32 %s176, 1
      %p180 = scmp.eq.s32.totalorder %s29, 1
      %p181 = scmp.ne.s32.totalorder %s176, %s178
      %p182 = scmp.eq.s32.totalorder %s29, 0
      %p183 = por %p181, %p182
      %p184 = scmp.ne.s32.totalorder %s176, %s178
      %p185 = scmp.eq.s32.totalorder %s34, 1
      %p186 = por %p184, %p185
      %p187 = scmp.ne.s32.totalorder %s178, %s179
      %p188 = scmp.eq.s32.totalorder %s34, 0
      %p189 = por %p187, %p188
      %p190 = scmp.ne.s32.totalorder %s178, %s179
      %p191 = scmp.eq.s32.totalorder %s35, 1
      %p192 = por %p190, %p191
      %p194 = scmp.ne.s32.totalorder %s179, %s193
      %p195 = scmp.eq.s32.totalorder %s35, 0
      %p196 = por %p194, %p195
      %s198 = sadd.s32 %s197, 1
      %p201 = scmp.eq.s32.totalorder %s29, 1
      %p202 = scmp.ne.s32.totalorder %s197, %s199
      %p203 = scmp.eq.s32.totalorder %s29, 0
      %p204 = por %p202, %p203
      %p205 = scmp.ne.s32.totalorder %s197, %s199
      %p206 = scmp.eq.s32.totalorder %s34, 1
      %p207 = por %p205, %p206
      %p208 = scmp.ne.s32.totalorder %s199, %s200
      %p209 = scmp.eq.s32.totalorder %s34, 0
      %p210 = por %p208, %p209
      %p211 = scmp.ne.s32.totalorder %s199, %s200
      %p212 = scmp.eq.s32.totalorder %s35, 1
      %p213 = por %p211, %p212
      %p215 = scmp.ne.s32.totalorder %s200, %s214
      %p216 = scmp.eq.s32.totalorder %s35, 0
      %p217 = por %p215, %p216
      %s219 = sadd.s32 %s218, 1
      %p222 = scmp.eq.s32.totalorder %s29, 1
      %p223 = scmp.ne.s32.totalorder %s218, %s220
      %p224 = scmp.eq.s32.totalorder %s29, 0
      %p225 = por %p223, %p224
      %p226 = scmp.ne.s32.totalorder %s218, %s220
      %p227 = scmp.eq.s32.totalorder %s34, 1
      %p228 = por %p226, %p227
      %p229 = scmp.ne.s32.totalorder %s220, %s221
      %p230 = scmp.eq.s32.totalorder %s34, 0
      %p231 = por %p229, %p230
      %p232 = scmp.ne.s32.totalorder %s220, %s221
      %p233 = scmp.eq.s32.totalorder %s35, 1
      %p234 = por %p232, %p233
      %p236 = scmp.ne.s32.totalorder %s221, %s235
      %p237 = scmp.eq.s32.totalorder %s35, 0
      %p238 = por %p236, %p237
      %s239 = ssub.s32 %s36, %s48
      %s240 = ssub.s32 %s37, %s44
      %s241 = sor.u32 %s239, %s240
      %p242 = scmp.eq.s32.totalorder %s241, 0
      %s244 = sadd.s32 %s243, 1
      %s245 = scalar_select %p242, %s243, %s244
      %p248 = pneg %p242
      %p249 = scmp.eq.s32.totalorder %s29, 1
      %p250 = por %p248, %p249
      %p251 = scmp.ne.s32.totalorder %s243, %s246
      %p252 = scmp.eq.s32.totalorder %s29, 0
      %p253 = por %p251, %p252
      %p254 = scmp.ne.s32.totalorder %s243, %s246
      %p255 = scmp.eq.s32.totalorder %s34, 1
      %p256 = por %p254, %p255
      %p257 = scmp.ne.s32.totalorder %s246, %s247
      %p258 = scmp.eq.s32.totalorder %s34, 0
      %p259 = por %p257, %p258
      %p260 = scmp.ne.s32.totalorder %s246, %s247
      %p261 = scmp.eq.s32.totalorder %s35, 1
      %p262 = por %p260, %p261
      %p264 = scmp.ne.s32.totalorder %s247, %s263
      %p265 = scmp.eq.s32.totalorder %s35, 0
      %p266 = por %p264, %p265
      %s267 = ssub.s32 %s36, %s48
      %s268 = ssub.s32 %s37, %s44
      %s269 = sor.u32 %s267, %s268
      %p270 = scmp.eq.s32.totalorder %s269, 0
      %s272 = sadd.s32 %s271, 1
      %s273 = scalar_select %p270, %s271, %s272
      %p276 = pneg %p270
      %p277 = scmp.eq.s32.totalorder %s29, 1
      %p278 = por %p276, %p277
      %p279 = scmp.ne.s32.totalorder %s271, %s274
      %p280 = scmp.eq.s32.totalorder %s29, 0
      %p281 = por %p279, %p280
      %p282 = scmp.ne.s32.totalorder %s271, %s274
      %p283 = scmp.eq.s32.totalorder %s34, 1
      %p284 = por %p282, %p283
      %p285 = scmp.ne.s32.totalorder %s274, %s275
      %p286 = scmp.eq.s32.totalorder %s34, 0
      %p287 = por %p285, %p286
      %p288 = scmp.ne.s32.totalorder %s274, %s275
      %p289 = scmp.eq.s32.totalorder %s35, 1
      %p290 = por %p288, %p289
      %p292 = scmp.ne.s32.totalorder %s275, %s291
      %p293 = scmp.eq.s32.totalorder %s35, 0
      %p294 = por %p292, %p293
      %p295 = scmp.le.s32.totalorder 1, %s29
      %p296 = scmp.lt.s32.totalorder %s29, 3
      %p297 = pnand %p295, %p296
      %p298 = pneg %p297
      // Predicated region
      $region9: #{tpu_custom_call.1} parent=5 // pred_check
        _
      $region10: #{tpu_custom_call.1} parent=5 // pred_check_branch
        %300 = sbr.rel (%p297) target = $region12
      $region11: #{tpu_custom_call.1} parent=5 // pred_region
        %s301 = ssub.s32 %s29, 1
        // Predicated region
        $region13: #{tpu_custom_call.1} parent=11 // pred_check
          %p302 = pneg %p168
        $region14: #{tpu_custom_call.1} parent=11 // pred_check_branch
          %304 = sbr.rel (%p302) target = $region16
        $region15: #{tpu_custom_call.1} parent=11 // pred_region
          %s306 = ssub.s32 256, 256
          %307 = vsyncadd [#allocation10], %s306
          %s308 = sshll.u32 [#allocation9], 4
          %s309 = int_to_ptr.vmem [resolvable:$true] %s308
          %314 = dma.hbm_to_vmem [thread:$0]  %s4, 256, %s309, [#allocation10], 64, 64, 4
        $region16: #{tpu_custom_call.1} parent=11 // pred_fallthru
          _
        // Predicated region
        $region17: #{tpu_custom_call.1} parent=11 // pred_check
          %p315 = pneg %p189
        $region18: #{tpu_custom_call.1} parent=11 // pred_check_branch
          %317 = sbr.rel (%p315) target = $region20
        $region19: #{tpu_custom_call.1} parent=11 // pred_region
          _
        $region20: #{tpu_custom_call.1} parent=11 // pred_fallthru
          _
        // Predicated region
        $region21: #{tpu_custom_call.1} parent=11 // pred_check
          %p318 = pneg %p210
        $region22: #{tpu_custom_call.1} parent=11 // pred_check_branch
          %320 = sbr.rel (%p318) target = $region24
        $region23: #{tpu_custom_call.1} parent=11 // pred_region
          _
        $region24: #{tpu_custom_call.1} parent=11 // pred_fallthru
          _
        // Predicated region
        $region25: #{tpu_custom_call.1} parent=11 // pred_check
          %p321 = pneg %p231
        $region26: #{tpu_custom_call.1} parent=11 // pred_check_branch
          %323 = sbr.rel (%p321) target = $region28
        $region27: #{tpu_custom_call.1} parent=11 // pred_region
          _
        $region28: #{tpu_custom_call.1} parent=11 // pred_fallthru
          _
      $region12: #{tpu_custom_call.1} parent=5 // pred_fallthru
        _
      %p324 = scmp.lt.s32.totalorder %s29, 2
      // Predicated region
      $region29: #{tpu_custom_call.1} parent=5 // pred_check
        %p325 = pneg %p324
      $region30: #{tpu_custom_call.1} parent=5 // pred_check_branch
        %327 = sbr.rel (%p325) target = $region32
      $region31: #{tpu_custom_call.1} parent=5 // pred_region
        // Predicated region
        $region33: #{tpu_custom_call.1} parent=31 // pred_check
          %p328 = pneg %p63
        $region34: #{tpu_custom_call.1} parent=31 // pred_check_branch
          %330 = sbr.rel (%p328) target = $region36
        $region35: #{tpu_custom_call.1} parent=31 // pred_region
          %s331 = sand.u32 %s53, 1
          %s332 = scalar_lea.sflag [#allocation4], %s331
          %s333 = sand.u32 %s53, 1
          %s334 = smul.addr %s333, 8
          %s335 = scalar_lea.vmem [#allocation3], %s334
          %s337 = ssub.s32 128, 128
          %338 = vsyncadd %s332, %s337
          %s339 = sadd.s32 %s37, %s36
          %s340 = smul.addr %s339, 128
          %s341 = scalar_lea.hbm %s0, %s340
          %s343 = sshll.u32 %s335, 4
          %s344 = int_to_ptr.vmem [resolvable:$true] %s343
          %346 = dma.hbm_to_vmem [thread:$0]  %s341, 128, %s344, %s332
        $region36: #{tpu_custom_call.1} parent=31 // pred_fallthru
          _
        // Predicated region
        $region37: #{tpu_custom_call.1} parent=31 // pred_check
          %p347 = pneg %p89
        $region38: #{tpu_custom_call.1} parent=31 // pred_check_branch
          %349 = sbr.rel (%p347) target = $region40
        $region39: #{tpu_custom_call.1} parent=31 // pred_region
          %s350 = sand.u32 %s29, 1
          %s351 = scalar_lea.sflag [#allocation7], %s350
          %s352 = sand.u32 %s79, 1
          %s353 = smul.addr %s352, 8
          %s354 = scalar_lea.vmem [#allocation6], %s353
          %s356 = ssub.s32 128, 128
          %357 = vsyncadd %s351, %s356
          %s358 = smul.addr %s36, 128
          %s359 = scalar_lea.hbm %s1, %s358
          %s361 = sshll.u32 %s354, 4
          %s362 = int_to_ptr.vmem [resolvable:$true] %s361
          %364 = dma.hbm_to_vmem [thread:$0]  %s359, 128, %s362, %s351
        $region40: #{tpu_custom_call.1} parent=31 // pred_fallthru
          _
        // Predicated region
        $region41: #{tpu_custom_call.1} parent=31 // pred_check
          %p365 = pneg %p115
        $region42: #{tpu_custom_call.1} parent=31 // pred_check_branch
          %367 = sbr.rel (%p365) target = $region44
        $region43: #{tpu_custom_call.1} parent=31 // pred_region
          %s368 = sand.u32 %s29, 1
          %s369 = scalar_lea.sflag [#allocation7], %s368
          %s370 = sand.u32 %s105, 1
          %s371 = smul.addr %s370, 8
          %s372 = scalar_lea.vmem [#allocation8], %s371
          %s374 = ssub.s32 128, 128
          %375 = vsyncadd %s369, %s374
          %s376 = smul.addr %s36, 128
          %s377 = scalar_lea.hbm %s2, %s376
          %s379 = sshll.u32 %s372, 4
          %s380 = int_to_ptr.vmem [resolvable:$true] %s379
          %382 = dma.hbm_to_vmem [thread:$0]  %s377, 128, %s380, %s369
        $region44: #{tpu_custom_call.1} parent=31 // pred_fallthru
          _
        // Predicated region
        $region45: #{tpu_custom_call.1} parent=31 // pred_check
          %p383 = pneg %p141
        $region46: #{tpu_custom_call.1} parent=31 // pred_check_branch
          %385 = sbr.rel (%p383) target = $region48
        $region47: #{tpu_custom_call.1} parent=31 // pred_region
          %p386 = scmp.lt.s32.totalorder %s36, 1
          %s387 = scalar_select %p386, %s36, 1
          %s388 = scalar_lea.vmem %s3, %s387
        $region48: #{tpu_custom_call.1} parent=31 // pred_fallthru
          _
      $region32: #{tpu_custom_call.1} parent=5 // pred_fallthru
        _
      %p389 = scmp.le.s32.totalorder 1, %s29
      %p390 = scmp.lt.s32.totalorder %s29, 3
      %p391 = pnand %p389, %p390
      %p392 = pneg %p391
      // Predicated region
      $region49: #{tpu_custom_call.1} parent=5 // pred_check
        _
      $region50: #{tpu_custom_call.1} parent=5 // pred_check_branch
        %394 = sbr.rel (%p391) target = $region52
      $region51: #{tpu_custom_call.1} parent=5 // pred_region
        %s395 = ssub.s32 %s29, 1
        %s396 = sand.u32 %s56, 1
        %s397 = scalar_lea.sflag [#allocation4], %s396
        %s398 = sand.u32 %s56, 1
        %s399 = smul.addr %s398, 8
        %s400 = scalar_lea.vmem [#allocation3], %s399
        // Predicated region
        $region53: #{tpu_custom_call.1} parent=51 // pred_check
          %p401 = pneg %p69
        $region54: #{tpu_custom_call.1} parent=51 // pred_check_branch
          %403 = sbr.rel (%p401) target = $region56
        $region55: #{tpu_custom_call.1} parent=51 // pred_region
          %404 = dma.done %s397, 128
        $region56: #{tpu_custom_call.1} parent=51 // pred_fallthru
          _
        %s405 = sand.u32 %s34, 1
        %s406 = scalar_lea.sflag [#allocation7], %s405
        %s407 = sand.u32 %s82, 1
        %s408 = smul.addr %s407, 8
        %s409 = scalar_lea.vmem [#allocation6], %s408
        // Predicated region
        $region57: #{tpu_custom_call.1} parent=51 // pred_check
          %p410 = pneg %p95
        $region58: #{tpu_custom_call.1} parent=51 // pred_check_branch
          %412 = sbr.rel (%p410) target = $region60
        $region59: #{tpu_custom_call.1} parent=51 // pred_region
          %413 = dma.done %s406, 128
        $region60: #{tpu_custom_call.1} parent=51 // pred_fallthru
          _
        %s414 = sand.u32 %s34, 1
        %s415 = scalar_lea.sflag [#allocation7], %s414
        %s416 = sand.u32 %s108, 1
        %s417 = smul.addr %s416, 8
        %s418 = scalar_lea.vmem [#allocation8], %s417
        // Predicated region
        $region61: #{tpu_custom_call.1} parent=51 // pred_check
          %p419 = pneg %p121
        $region62: #{tpu_custom_call.1} parent=51 // pred_check_branch
          %421 = sbr.rel (%p419) target = $region64
        $region63: #{tpu_custom_call.1} parent=51 // pred_region
          %422 = dma.done %s415, 128
        $region64: #{tpu_custom_call.1} parent=51 // pred_fallthru
          _
        // Predicated region
        $region65: #{tpu_custom_call.1} parent=51 // pred_check
          %p423 = pneg %p168
        $region66: #{tpu_custom_call.1} parent=51 // pred_check_branch
          %425 = sbr.rel (%p423) target = $region68
        $region67: #{tpu_custom_call.1} parent=51 // pred_region
          %426 = dma.done [#allocation10], 256
        $region68: #{tpu_custom_call.1} parent=51 // pred_fallthru
          _
        %s427 = sand.u32 %s56, 1
        %s428 = scalar_lea.sflag [#allocation4], %s427
        %s429 = sand.u32 %s56, 1
        %s430 = smul.addr %s429, 8
        %s431 = scalar_lea.vmem [#allocation3], %s430
        %p432 = pneg %p69
        %p433 = pneg %p66
        %s434 = sand.u32 %s34, 1
        %s435 = scalar_lea.sflag [#allocation7], %s434
        %s436 = sand.u32 %s82, 1
        %s437 = smul.addr %s436, 8
        %s438 = scalar_lea.vmem [#allocation6], %s437
        %p439 = pneg %p95
        %p440 = pneg %p92
        %s441 = sand.u32 %s34, 1
        %s442 = scalar_lea.sflag [#allocation7], %s441
        %s443 = sand.u32 %s108, 1
        %s444 = smul.addr %s443, 8
        %s445 = scalar_lea.vmem [#allocation8], %s444
        %p446 = pneg %p121
        %p447 = pneg %p118
        %p448 = scmp.lt.s32.totalorder %s38, 1
        %s449 = scalar_select %p448, %s38, 1
        %s450 = scalar_lea.vmem %s3, %s449
        %p451 = pneg %p147
        %p452 = pneg %p144
        %p453 = pneg %p168
        %p454 = pneg %p165
        %p455 = pneg %p189
        %p456 = pneg %p186
        %p457 = pneg %p210
        %p458 = pneg %p207
        %p459 = pneg %p231
        %p460 = pneg %p228
        %p461 = pneg %p259
        %p462 = pneg %p256
        %s463 = sand.u32 %s246, 1
        %s464 = scalar_lea.sflag [#allocation5], %s463
        %s465 = sand.u32 %s246, 1
        %s466 = smul.addr %s465, 8
        %s467 = scalar_lea.vmem [#allocation11], %s466
        %p468 = pneg %p287
        %p469 = pneg %p284
        %s470 = sand.u32 %s274, 1
        %s471 = scalar_lea.sflag [#allocation13], %s470
        %s472 = sand.u32 %s274, 1
        %s473 = smul.addr %s472, 8
        %s474 = scalar_lea.vmem [#allocation12], %s473
        %p475 = scmp.lt.s32.totalorder %s38, 1
        %s476 = scalar_select %p475, %s38, 1
        %s477 = scalar_lea.vmem %s3, %s476
        %p479 = scmp.eq.s32.totalorder %s39, 0
        // Predicated region
        $region69: #{tpu_custom_call.1} parent=51 // pred_check
          %p480 = pneg %p479
        $region70: #{tpu_custom_call.1} parent=51 // pred_check_branch
          %482 = sbr.rel (%p480) target = $region72
        $region71: #{tpu_custom_call.1} parent=51 // pred_region
          %v483 = vld [vmem:[%s409] sm:$0xff]
          %v484 = vld [vmem:[%s418] sm:$0xff]
          %v485 = vpack.c.bf16 %v484, %v483
          %v486 = vld [vmem:[#allocation9] sm:$0xf]
          %v487 = vld [vmem:[#allocation9 + $0x4] sm:$0xf]
          %v488 = vld [vmem:[#allocation9 + $0x8] sm:$0xf]
          %v489 = vld [vmem:[#allocation9 + $0xc] sm:$0xf]
          %v490 = vld [vmem:[%s5] sm:$0x1]
          %v492 = vlaneseq
          %v493 = vshrl.u32 %v492, 7
          %v494 = vsub.s32 0, %v493
          %v495 = vrot.slane %v490, %v494
          %v501 = vunpack.c.l.b16 %v486
          %v502 = vunpack.c.l.b16 %v487
          %v503 = vunpack.c.l.b16 %v488
          %v504 = vunpack.c.l.b16 %v489
          %v505 = vpack.c.b16 %v502, %v501
          %v506 = vpack.c.b16 %v504, %v503
          %vm509 = vcmask 261120
          %v511 = vsel %vm509, %v485, 0
          %513 = vmatprep.subr.bf16.mxu0 0
          %514 = vmatpush1.bf16.msra.mxu0 %v505
          %515 = vmatprep.subr.bf16.mxu0 0
          %516 = vmatpush1.bf16.msra.mxu0 %v506
          %517 = vmatprep.subr.bf16.mxu0 0
          %518 = vmatpush1.bf16.msra.mxu0 0
          %519 = vmatprep.subr.bf16.mxu0 0
          %520 = vmatpush1.bf16.msra.mxu0 0
          %521 = vmatprep.subr.bf16.mxu0 0
          %522 = vmatpush1.bf16.msra.mxu0 0
          %523 = vmatprep.subr.bf16.mxu0 0
          %524 = vmatpush1.bf16.msra.mxu0 0
          %525 = vmatprep.subr.bf16.mxu0 0
          %526 = vmatpush1.bf16.msra.mxu0 0
          %527 = vmatprep.subr.bf16.mxu0 0
          %528 = vmatpush1.bf16.msra.mxu0 0
          %529 = vmatprep.subr.bf16.mxu0 0
          %530 = vmatpush1.bf16.msra.mxu0 0
          %531 = vmatprep.subr.bf16.mxu0 0
          %532 = vmatpush1.bf16.msra.mxu0 0
          %533 = vmatprep.subr.bf16.mxu0 0
          %534 = vmatpush1.bf16.msra.mxu0 0
          %535 = vmatprep.subr.bf16.mxu0 0
          %536 = vmatpush1.bf16.msra.mxu0 0
          %537 = vmatprep.subr.bf16.mxu0 0
          %538 = vmatpush1.bf16.msra.mxu0 0
          %539 = vmatprep.subr.bf16.mxu0 0
          %540 = vmatpush1.bf16.msra.mxu0 0
          %541 = vmatprep.subr.bf16.mxu0 0
          %542 = vmatpush1.bf16.msra.mxu0 0
          %543 = vmatprep.subr.bf16.mxu0 0
          %544 = vmatpush1.bf16.msra.mxu0 0
          %545 = vmatprep.mubr.bf16.mxu0 0
          %546 = vmatmul.mubr.bf16.gmra.mrb[0].mxu0 %v511
          %v547 = vpop.f32.mrb[0].mxu0
          %v548 = vadd.f32 %v495, %v547
          %v549 = vpop.f32.mrb[0].mxu0
          %v550 = vpop.f32.mrb[0].mxu0
          %v551 = vadd.f32 %v495, %v550
          %v552 = vpop.f32.mrb[0].mxu0
          %553 = vdwg.mxu0
          %554 = vst.msk [vmem:[#allocation2] sm:$0xff] %vm509, %v548
          %555 = vst.msk [vmem:[#allocation2 + $0x8] sm:$0xff] %vm509, %v551
        $region72: #{tpu_custom_call.1} parent=51 // pred_fallthru
          _
        %v556 = vld [vmem:[%s400] sm:$0xff]
        %v557 = vpack.c.bf16 %v556, %v556
        %v558 = vld [vmem:[#allocation9] sm:$0xf]
        %v559 = vld [vmem:[#allocation9 + $0x4] sm:$0xf]
        %v560 = vld [vmem:[#allocation9 + $0x8] sm:$0xf]
        %v561 = vld [vmem:[#allocation9 + $0xc] sm:$0xf]
        %v562 = vld [vmem:[%s5] sm:$0x1]
        %v564 = vlaneseq
        %v565 = vshrl.u32 %v564, 7
        %v566 = vsub.s32 0, %v565
        %v567 = vrot.slane %v562, %v566
        %v573 = vunpack.c.l.b16 %v558
        %v574 = vunpack.c.l.b16 %v559
        %v575 = vunpack.c.l.b16 %v560
        %v576 = vunpack.c.l.b16 %v561
        %v577 = vpack.c.b16 %v574, %v573
        %v578 = vpack.c.b16 %v576, %v575
        %vm581 = vcmask 261120
        %v583 = vsel %vm581, %v557, 0
        %585 = vmatprep.subr.bf16.mxu0 0
        %586 = vmatpush1.bf16.msra.mxu0 %v577
        %587 = vmatprep.subr.bf16.mxu0 0
        %588 = vmatpush1.bf16.msra.mxu0 %v578
        %589 = vmatprep.subr.bf16.mxu0 0
        %590 = vmatpush1.bf16.msra.mxu0 0
        %591 = vmatprep.subr.bf16.mxu0 0
        %592 = vmatpush1.bf16.msra.mxu0 0
        %593 = vmatprep.subr.bf16.mxu0 0
        %594 = vmatpush1.bf16.msra.mxu0 0
        %595 = vmatprep.subr.bf16.mxu0 0
        %596 = vmatpush1.bf16.msra.mxu0 0
        %597 = vmatprep.subr.bf16.mxu0 0
        %598 = vmatpush1.bf16.msra.mxu0 0
        %599 = vmatprep.subr.bf16.mxu0 0
        %600 = vmatpush1.bf16.msra.mxu0 0
        %601 = vmatprep.subr.bf16.mxu0 0
        %602 = vmatpush1.bf16.msra.mxu0 0
        %603 = vmatprep.subr.bf16.mxu0 0
        %604 = vmatpush1.bf16.msra.mxu0 0
        %605 = vmatprep.subr.bf16.mxu0 0
        %606 = vmatpush1.bf16.msra.mxu0 0
        %607 = vmatprep.subr.bf16.mxu0 0
        %608 = vmatpush1.bf16.msra.mxu0 0
        %609 = vmatprep.subr.bf16.mxu0 0
        %610 = vmatpush1.bf16.msra.mxu0 0
        %611 = vmatprep.subr.bf16.mxu0 0
        %612 = vmatpush1.bf16.msra.mxu0 0
        %613 = vmatprep.subr.bf16.mxu0 0
        %614 = vmatpush1.bf16.msra.mxu0 0
        %615 = vmatprep.subr.bf16.mxu0 0
        %616 = vmatpush1.bf16.msra.mxu0 0
        %617 = vmatprep.mubr.bf16.mxu0 0
        %618 = vmatmul.mubr.bf16.gmra.mrb[0].mxu0 %v583
        %v619 = vpop.f32.mrb[0].mxu0
        %v620 = vadd.f32 %v567, %v619
        %v621 = vpop.f32.mrb[0].mxu0
        %v622 = vpop.f32.mrb[0].mxu0
        %v623 = vpop.f32.mrb[0].mxu0
        %624 = vdwg.mxu0
        %v625 = vmul.f32 %v620, 0.17677669
        %v626 = vpack.c.bf16 %v625, %v625
        %v627 = vld [vmem:[#allocation2] sm:$0xff]
        %v628 = vpack.c.bf16 %v627, %v627
        %v629 = vld [vmem:[#allocation2 + $0x8] sm:$0xff]
        %v630 = vpack.c.bf16 %v629, %v629
        %v632 = vsel %vm581, %v626, 0
        %v635 = vsel %vm581, %v628, 0
        %637 = vmatprep.subr.bf16.mxu0 0
        %638 = vmatpush1.bf16.xpose.msra.mxu0 %v635
        %639 = vmatprep.subr.bf16.mxu0 0
        %640 = vmatpush1.bf16.xpose.msra.mxu0 0
        %641 = vmatprep.subr.bf16.mxu0 0
        %642 = vmatpush1.bf16.xpose.msra.mxu0 0
        %643 = vmatprep.subr.bf16.mxu0 0
        %644 = vmatpush1.bf16.xpose.msra.mxu0 0
        %645 = vmatprep.subr.bf16.mxu0 0
        %646 = vmatpush1.bf16.xpose.msra.mxu0 0
        %647 = vmatprep.subr.bf16.mxu0 0
        %648 = vmatpush1.bf16.xpose.msra.mxu0 0
        %649 = vmatprep.subr.bf16.mxu0 0
        %650 = vmatpush1.bf16.xpose.msra.mxu0 0
        %651 = vmatprep.subr.bf16.mxu0 0
        %652 = vmatpush1.bf16.xpose.msra.mxu0 0
        %653 = vmatprep.subr.bf16.mxu0 0
        %654 = vmatpush1.bf16.xpose.msra.mxu0 0
        %655 = vmatprep.subr.bf16.mxu0 0
        %656 = vmatpush1.bf16.xpose.msra.mxu0 0
        %657 = vmatprep.subr.bf16.mxu0 0
        %658 = vmatpush1.bf16.xpose.msra.mxu0 0
        %659 = vmatprep.subr.bf16.mxu0 0
        %660 = vmatpush1.bf16.xpose.msra.mxu0 0
        %661 = vmatprep.subr.bf16.mxu0 0
        %662 = vmatpush1.bf16.xpose.msra.mxu0 0
        %663 = vmatprep.subr.bf16.mxu0 0
        %664 = vmatpush1.bf16.xpose.msra.mxu0 0
        %665 = vmatprep.subr.bf16.mxu0 0
        %666 = vmatpush1.bf16.xpose.msra.mxu0 0
        %667 = vmatprep.subr.bf16.mxu0 0
        %668 = vmatpush1.bf16.xpose.msra.mxu0 0
        %669 = vmatprep.mubr.bf16.mxu0 0
        %670 = vmatmul.mubr.bf16.gmra.mrb[0].mxu0 %v632
        %v671 = vpop.f32.mrb[0].mxu0
        %v672 = vadd.f32 0.0, %v671
        %v673 = vpop.f32.mrb[0].mxu0
        %v674 = vpop.f32.mrb[0].mxu0
        %v675 = vpop.f32.mrb[0].mxu0
        %676 = vdwg.mxu0
        %v677 = vld [vmem:[%s477] sm:$0x1]
        %vm678 = vcmp.eq.s32.totalorder %v677, 0
        %v679 = vsel %vm678, 1, 0
        %v680 = vlaneseq
        %v681 = vshrl.u32 %v680, 7
        %v682 = vsub.s32 0, %v681
        %v683 = vrot.slane %v679, %v682
        %vm684 = vcmp.eq.s32.totalorder %v683, 1
        %v685 = vsel %vm684, -1e+09, %v672
        %vm686 = vcmask 64512
        %v687 = vsel %vm686, %v685, -inf
        %688 = vmax.xlane.f32.xlu0 %v687
        %v689 = vpop.xlane.xlu0 %688
        %v690 = vsub.f32 %v685, %v689
        %v691 = vmul.f32 %v690, 1.442695
        %v692 = vpow.pop %v691
        %v693 = vsel %vm686, %v692, 0.0
        %694 = vadd.xlane.f32.xlu0 %v693
        %v695 = vpop.xlane.xlu0 %694
        %v696 = vrcp.pop %v695
        %v697 = vmul.f32 %v692, %v696
        %698 = vst.msk [vmem:[%s474] sm:$0xff] %vm686, %v697
        %v699 = vpack.c.bf16 %v697, %v697
        %v701 = vsel %vm686, %v699, 0
        %vm703 = vcmask 1043456
        %v705 = vsel %vm703, %v630, 0
        %707 = vmatprep.subr.bf16.mxu0 0
        %708 = vmatpush1.bf16.msra.mxu0 %v705
        %709 = vmatprep.subr.bf16.mxu0 0
        %710 = vmatpush1.bf16.msra.mxu0 0
        %711 = vmatprep.subr.bf16.mxu0 0
        %712 = vmatpush1.bf16.msra.mxu0 0
        %713 = vmatprep.subr.bf16.mxu0 0
        %714 = vmatpush1.bf16.msra.mxu0 0
        %715 = vmatprep.subr.bf16.mxu0 0
        %716 = vmatpush1.bf16.msra.mxu0 0
        %717 = vmatprep.subr.bf16.mxu0 0
        %718 = vmatpush1.bf16.msra.mxu0 0
        %719 = vmatprep.subr.bf16.mxu0 0
        %720 = vmatpush1.bf16.msra.mxu0 0
        %721 = vmatprep.subr.bf16.mxu0 0
        %722 = vmatpush1.bf16.msra.mxu0 0
        %723 = vmatprep.subr.bf16.mxu0 0
        %724 = vmatpush1.bf16.msra.mxu0 0
        %725 = vmatprep.subr.bf16.mxu0 0
        %726 = vmatpush1.bf16.msra.mxu0 0
        %727 = vmatprep.subr.bf16.mxu0 0
        %728 = vmatpush1.bf16.msra.mxu0 0
        %729 = vmatprep.subr.bf16.mxu0 0
        %730 = vmatpush1.bf16.msra.mxu0 0
        %731 = vmatprep.subr.bf16.mxu0 0
        %732 = vmatpush1.bf16.msra.mxu0 0
        %733 = vmatprep.subr.bf16.mxu0 0
        %734 = vmatpush1.bf16.msra.mxu0 0
        %735 = vmatprep.subr.bf16.mxu0 0
        %736 = vmatpush1.bf16.msra.mxu0 0
        %737 = vmatprep.subr.bf16.mxu0 0
        %738 = vmatpush1.bf16.msra.mxu0 0
        %739 = vmatprep.mubr.bf16.mxu0 0
        %740 = vmatmul.mubr.bf16.gmra.mrb[0].mxu0 %v701
        %v741 = vpop.f32.mrb[0].mxu0
        %v742 = vadd.f32 0.0, %v741
        %v743 = vpop.f32.mrb[0].mxu0
        %v744 = vpop.f32.mrb[0].mxu0
        %v745 = vpop.f32.mrb[0].mxu0
        %746 = vdwg.mxu0
        %v747 = vpack.c.bf16 %v742, %v742
        %v748 = vld [vmem:[%s6] sm:$0xf]
        %v749 = vld [vmem:[%s6 + $0x4] sm:$0xf]
        %v750 = vld [vmem:[%s6 + $0x8] sm:$0xf]
        %v751 = vld [vmem:[%s6 + $0xc] sm:$0xf]
        %v752 = vld [vmem:[%s7] sm:$0x1]
        %v754 = vlaneseq
        %v755 = vshrl.u32 %v754, 7
        %v756 = vsub.s32 0, %v755
        %v757 = vrot.slane %v752, %v756
        %v763 = vunpack.c.l.b16 %v748
        %v764 = vunpack.c.l.b16 %v749
        %v765 = vunpack.c.l.b16 %v750
        %v766 = vunpack.c.l.b16 %v751
        %v767 = vpack.c.b16 %v764, %v763
        %v768 = vpack.c.b16 %v766, %v765
        %v772 = vsel %vm581, %v747, 0
        %774 = vmatprep.subr.bf16.mxu0 0
        %775 = vmatpush1.bf16.msra.mxu0 %v767
        %776 = vmatprep.subr.bf16.mxu0 0
        %777 = vmatpush1.bf16.msra.mxu0 %v768
        %778 = vmatprep.subr.bf16.mxu0 0
        %779 = vmatpush1.bf16.msra.mxu0 0
        %780 = vmatprep.subr.bf16.mxu0 0
        %781 = vmatpush1.bf16.msra.mxu0 0
        %782 = vmatprep.subr.bf16.mxu0 0
        %783 = vmatpush1.bf16.msra.mxu0 0
        %784 = vmatprep.subr.bf16.mxu0 0
        %785 = vmatpush1.bf16.msra.mxu0 0
        %786 = vmatprep.subr.bf16.mxu0 0
        %787 = vmatpush1.bf16.msra.mxu0 0
        %788 = vmatprep.subr.bf16.mxu0 0
        %789 = vmatpush1.bf16.msra.mxu0 0
        %790 = vmatprep.subr.bf16.mxu0 0
        %791 = vmatpush1.bf16.msra.mxu0 0
        %792 = vmatprep.subr.bf16.mxu0 0
        %793 = vmatpush1.bf16.msra.mxu0 0
        %794 = vmatprep.subr.bf16.mxu0 0
        %795 = vmatpush1.bf16.msra.mxu0 0
        %796 = vmatprep.subr.bf16.mxu0 0
        %797 = vmatpush1.bf16.msra.mxu0 0
        %798 = vmatprep.subr.bf16.mxu0 0
        %799 = vmatpush1.bf16.msra.mxu0 0
        %800 = vmatprep.subr.bf16.mxu0 0
        %801 = vmatpush1.bf16.msra.mxu0 0
        %802 = vmatprep.subr.bf16.mxu0 0
        %803 = vmatpush1.bf16.msra.mxu0 0
        %804 = vmatprep.subr.bf16.mxu0 0
        %805 = vmatpush1.bf16.msra.mxu0 0
        %806 = vmatprep.mubr.bf16.mxu0 0
        %807 = vmatmul.mubr.bf16.gmra.mrb[0].mxu0 %v772
        %v808 = vpop.f32.mrb[0].mxu0
        %v809 = vadd.f32 %v757, %v808
        %v810 = vpop.f32.mrb[0].mxu0
        %v811 = vpop.f32.mrb[0].mxu0
        %v812 = vpop.f32.mrb[0].mxu0
        %813 = vdwg.mxu0
        %814 = vst.msk [vmem:[%s467] sm:$0xff] %vm581, %v809
        %s815 = sand.u32 %s246, 1
        %s816 = scalar_lea.sflag [#allocation5], %s815
        %s817 = sand.u32 %s246, 1
        %s818 = smul.addr %s817, 8
        %s819 = scalar_lea.vmem [#allocation11], %s818
        %s820 = sand.u32 %s274, 1
        %s821 = scalar_lea.sflag [#allocation13], %s820
        %s822 = sand.u32 %s274, 1
        %s823 = smul.addr %s822, 8
        %s824 = scalar_lea.vmem [#allocation12], %s823
        // Predicated region
        $region73: #{tpu_custom_call.1} parent=51 // pred_check
          %p825 = pneg %p256
        $region74: #{tpu_custom_call.1} parent=51 // pred_check_branch
          %827 = sbr.rel (%p825) target = $region76
        $region75: #{tpu_custom_call.1} parent=51 // pred_region
          %s829 = ssub.s32 128, 128
          %830 = vsyncadd %s816, %s829
          %s831 = sadd.s32 %s39, %s38
          %s832 = smul.addr %s831, 128
          %s833 = scalar_lea.hbm %s8, %s832
          %s835 = sshll.u32 %s819, 4
          %s836 = int_to_ptr.vmem [resolvable:$true] %s835
          %838 = dma.vmem_to_hbm [thread:$0]  %s836, 128, %s833, %s816
        $region76: #{tpu_custom_call.1} parent=51 // pred_fallthru
          _
        // Predicated region
        $region77: #{tpu_custom_call.1} parent=51 // pred_check
          %p839 = pneg %p284
        $region78: #{tpu_custom_call.1} parent=51 // pred_check_branch
          %841 = sbr.rel (%p839) target = $region80
        $region79: #{tpu_custom_call.1} parent=51 // pred_region
          %s843 = ssub.s32 128, 128
          %844 = vsyncadd %s821, %s843
          %s845 = sadd.s32 %s39, %s38
          %s846 = smul.addr %s845, 128
          %s847 = scalar_lea.hbm %s9, %s846
          %s849 = sshll.u32 %s824, 4
          %s850 = int_to_ptr.vmem [resolvable:$true] %s849
          %852 = dma.vmem_to_hbm [thread:$0]  %s850, 128, %s847, %s821
        $region80: #{tpu_custom_call.1} parent=51 // pred_fallthru
          _
      $region52: #{tpu_custom_call.1} parent=5 // pred_fallthru
        _
      %p853 = scmp.le.s32.totalorder 2, %s29
      // Predicated region
      $region81: #{tpu_custom_call.1} parent=5 // pred_check
        %p854 = pneg %p853
      $region82: #{tpu_custom_call.1} parent=5 // pred_check_branch
        %856 = sbr.rel (%p854) target = $region84
      $region83: #{tpu_custom_call.1} parent=5 // pred_region
        %s857 = ssub.s32 %s29, 2
        // Predicated region
        $region85: #{tpu_custom_call.1} parent=83 // pred_check
          %p858 = pneg %p262
        $region86: #{tpu_custom_call.1} parent=83 // pred_check_branch
          %860 = sbr.rel (%p858) target = $region88
        $region87: #{tpu_custom_call.1} parent=83 // pred_region
          %s861 = sand.u32 %s247, 1
          %s862 = scalar_lea.sflag [#allocation5], %s861
          %s863 = sand.u32 %s247, 1
          %s864 = smul.addr %s863, 8
          %s865 = scalar_lea.vmem [#allocation11], %s864
          %866 = dma.done %s862, 128
        $region88: #{tpu_custom_call.1} parent=83 // pred_fallthru
          _
        // Predicated region
        $region89: #{tpu_custom_call.1} parent=83 // pred_check
          %p867 = pneg %p290
        $region90: #{tpu_custom_call.1} parent=83 // pred_check_branch
          %869 = sbr.rel (%p867) target = $region92
        $region91: #{tpu_custom_call.1} parent=83 // pred_region
          %s870 = sand.u32 %s275, 1
          %s871 = scalar_lea.sflag [#allocation13], %s870
          %s872 = sand.u32 %s275, 1
          %s873 = smul.addr %s872, 8
          %s874 = scalar_lea.vmem [#allocation12], %s873
          %875 = dma.done %s871, 128
        $region92: #{tpu_custom_call.1} parent=83 // pred_fallthru
          _
      $region84: #{tpu_custom_call.1} parent=5 // pred_fallthru
        _
    $region6: #{tpu_custom_call.1} parent=1 // loop_footer
      %s33 = sadd.s32 1, %s29
    $region7: #{tpu_custom_call.1} parent=1 // loop_footer_branch
      %28 = sbr.rel target = $region3
    $region8: #{tpu_custom_call.1} parent=1 // loop_exit
      _
    %876 = vsyncpa [#allocation4], 1
    %s877 = scalar_lea.sflag [#allocation4], 1
    %878 = vsyncpa %s877, 1
    %879 = vsyncpa [#allocation7], 1
    %s880 = scalar_lea.sflag [#allocation7], 1
    %881 = vsyncpa %s880, 1
    %882 = vsyncpa [#allocation10], 1
    %883 = vsyncpa [#allocation5], 1
    %s884 = scalar_lea.sflag [#allocation5], 1
    %885 = vsyncpa %s884, 1
    %886 = vsyncpa [#allocation13], 1
    %s887 = scalar_lea.sflag [#allocation13], 1
    %888 = vsyncpa %s887, 1

</llo_original>
